<compile_context>
chip_gen: v5e
topology: v5e:2x2
jax: 0.10.0
libtpu: 0.0.40
codegen_flags: <defaults>
</compile_context>

<pallas_src>
import functools

import jax
import jax.numpy as jnp
from jax.experimental import pallas as pl
from jax.experimental.pallas import tpu as pltpu


def _lstm_value_kernel(x_ref, wih_ref, whh_ref, b_ref,
                       w1_ref, b1_ref, w2_ref, b2_ref,
                       out_ref, xproj_ref, *, T, Bp, H):
    # ---- Hoisted input projection (once, outside the recurrence) ----------
    # One (T*Bp, D) @ (D, 4H) MXU op; pre-summed LSTM bias (b_ih + b_hh)
    # folded into the same write.
    xproj_ref[...] = (
        jnp.dot(x_ref[...], wih_ref[...], preferred_element_type=jnp.float32)
        + b_ref[...])                                  # (T*Bp, 4H)

    whh = whh_ref[...]                                 # (H, 4H), loaded once

    h0 = jnp.zeros((Bp, H), jnp.float32)
    c0 = jnp.zeros((Bp, H), jnp.float32)

    # PyTorch gate layout: [i | f | g | o], each of width H.
    def step(t, carry):
        h_prev, c_prev = carry
        row = pl.multiple_of(t * Bp, 8)                # sublane-aligned start
        gates = (xproj_ref[pl.ds(row, Bp), :]
                 + jnp.dot(h_prev, whh, preferred_element_type=jnp.float32))
        # Two full-vreg EUP passes (sigmoid + tanh on the whole gate tile);
        # gate extraction is then cheap lane slicing consumed immediately.
        sig_all = jax.nn.sigmoid(gates)
        tnh_all = jnp.tanh(gates)
        i_g = sig_all[:, 0 * H:1 * H]
        f_g = sig_all[:, 1 * H:2 * H]
        g_g = tnh_all[:, 2 * H:3 * H]
        o_g = sig_all[:, 3 * H:4 * H]
        c_new = f_g * c_prev + i_g * g_g
        h_new = o_g * jnp.tanh(c_new)
        return h_new, c_new

    # Full unroll: T is small, gives the scheduler cross-step visibility.
    h_last, _ = jax.lax.fori_loop(0, T, step, (h0, c0), unroll=True)

    # ---- Value MLP head on the final hidden state --------------------------
    z = jnp.maximum(
        jnp.dot(h_last, w1_ref[...], preferred_element_type=jnp.float32)
        + b1_ref[...], 0.0)                            # Linear -> ReLU
    out_ref[...] = (
        jnp.dot(z, w2_ref[...], preferred_element_type=jnp.float32)
        + b2_ref[...])                                 # Linear -> (Bp, 1)


def critic_value_pallas(s, params):
    """s: [B, T, D] float32.  Returns value: [B, 1] float32."""
    B, T, D = s.shape
    H = params["whh"].shape[0]

    # Pad batch to a full sublane group; padded rows are dropped at the end.
    Bp = max(8, ((B + 7) // 8) * 8)
    s_p = jnp.pad(s, ((0, Bp - B), (0, 0), (0, 0)))            # [Bp, T, D]
    # Time-major then flatten so the hoisted input projection is one matmul
    # and each per-step gate read is a contiguous (Bp, 4H) slab.
    x_flat = jnp.transpose(s_p, (1, 0, 2)).reshape(T * Bp, D)  # [T*Bp, D]

    kernel = functools.partial(_lstm_value_kernel, T=T, Bp=Bp, H=H)
    vmem = lambda: pl.BlockSpec(memory_space=pltpu.MemorySpace.VMEM)

    out = pl.pallas_call(
        kernel,
        out_shape=jax.ShapeDtypeStruct((Bp, 1), jnp.float32),
        in_specs=[vmem() for _ in range(8)],   # everything fully VMEM-resident
        out_specs=vmem(),
        scratch_shapes=[pltpu.VMEM((T * Bp, 4 * H), jnp.float32)],  # x@W_ih + b
    )(x_flat, params["wih"], params["whh"], params["b"],
      params["w1"], params["b1"], params["w2"], params["b2"])
    return out[:B]


def critic_value_ref(s, params):
    """Pure-JAX reference matching PyTorch nn.LSTM + MLP head."""
    B, T, D = s.shape
    H = params["whh"].shape[0]
    h = jnp.zeros((B, H), jnp.float32)
    c = jnp.zeros((B, H), jnp.float32)
    for t in range(T):
        gates = s[:, t, :] @ params["wih"] + h @ params["whh"] + params["b"]
        i_g = jax.nn.sigmoid(gates[:, 0 * H:1 * H])
        f_g = jax.nn.sigmoid(gates[:, 1 * H:2 * H])
        g_g = jnp.tanh(gates[:, 2 * H:3 * H])
        o_g = jax.nn.sigmoid(gates[:, 3 * H:4 * H])
        c = f_g * c + i_g * g_g
        h = o_g * jnp.tanh(c)
    z = jnp.maximum(h @ params["w1"] + params["b1"], 0.0)
    return z @ params["w2"] + params["b2"]


def make_params(key, state_dim, hidden_dim):
    ks = jax.random.split(key, 8)
    scale = 0.1
    # LSTM params stored transposed w.r.t. PyTorch (input on rows, gates on cols).
    wih = scale * jax.random.normal(ks[0], (state_dim, 4 * hidden_dim), jnp.float32)
    whh = scale * jax.random.normal(ks[1], (hidden_dim, 4 * hidden_dim), jnp.float32)
    b_ih = scale * jax.random.normal(ks[2], (1, 4 * hidden_dim), jnp.float32)
    b_hh = scale * jax.random.normal(ks[3], (1, 4 * hidden_dim), jnp.float32)
    w1 = scale * jax.random.normal(ks[4], (hidden_dim, hidden_dim), jnp.float32)
    b1 = scale * jax.random.normal(ks[5], (1, hidden_dim), jnp.float32)
    w2 = scale * jax.random.normal(ks[6], (hidden_dim, 1), jnp.float32)
    b2 = scale * jax.random.normal(ks[7], (1, 1), jnp.float32)
    return {"wih": wih, "whh": whh, "b": b_ih + b_hh,
            "w1": w1, "b1": b1, "w2": w2, "b2": b2}


if __name__ == "__main__":
    B, T, D, H = 2, 8, 4, 32   # batch, seq, state_dim, hidden_dim
    key = jax.random.PRNGKey(0)
    k_s, k_p = jax.random.split(key)
    s = jax.random.normal(k_s, (B, T, D), jnp.float32)
    params = make_params(k_p, D, H)

    value = critic_value_pallas(s, params)
    value = jax.block_until_ready(value)

    ref = critic_value_ref(s, params)
    assert value.shape == (B, 1)
    assert jnp.allclose(value, ref, rtol=1e-4, atol=1e-4), (value, ref)
    print("KERNEL_OK")
</pallas_src>

<mosaic_0001>
module attributes {stable_mosaic.version = 11 : i64} {
  func.func @_lstm_value_kernel(%arg0: memref<64x4xf32, #tpu.memory_space<vmem>>, %arg1: memref<4x128xf32, #tpu.memory_space<vmem>>, %arg2: memref<32x128xf32, #tpu.memory_space<vmem>>, %arg3: memref<1x128xf32, #tpu.memory_space<vmem>>, %arg4: memref<32x32xf32, #tpu.memory_space<vmem>>, %arg5: memref<1x32xf32, #tpu.memory_space<vmem>>, %arg6: memref<32x1xf32, #tpu.memory_space<vmem>>, %arg7: memref<1x1xf32, #tpu.memory_space<vmem>>, %arg8: memref<8x1xf32, #tpu.memory_space<vmem>>, %arg9: memref<64x128xf32, #tpu.memory_space<vmem>>) attributes {dimension_semantics = [], scalar_prefetch = 0 : i64, scratch_operands = 1 : i64, tpu.core_type = #tpu.core_type<tc>} {
    %c0 = arith.constant 0 : index
    %c0_0 = arith.constant 0 : index
    %0 = vector.load %arg0[%c0, %c0_0] : memref<64x4xf32, #tpu.memory_space<vmem>>, vector<64x4xf32>
    %c0_1 = arith.constant 0 : index
    %c0_2 = arith.constant 0 : index
    %1 = vector.load %arg1[%c0_1, %c0_2] : memref<4x128xf32, #tpu.memory_space<vmem>>, vector<4x128xf32>
    %cst = arith.constant dense<0.000000e+00> : vector<64x128xf32>
    %2 = tpu.matmul %0, %1, %cst {dimension_numbers = #tpu.dot_dimension_numbers<[1], [0], [0], [1], [0, 0, 1, 1], [], []>} : vector<64x4xf32>, vector<4x128xf32>, vector<64x128xf32> -> vector<64x128xf32>
    %c0_3 = arith.constant 0 : index
    %c0_4 = arith.constant 0 : index
    %3 = vector.load %arg3[%c0_3, %c0_4] : memref<1x128xf32, #tpu.memory_space<vmem>>, vector<1x128xf32>
    %4 = vector.broadcast %3 : vector<1x128xf32> to vector<64x128xf32>
    %5 = arith.addf %2, %4 : vector<64x128xf32>
    %c0_5 = arith.constant 0 : index
    %c0_6 = arith.constant 0 : index
    %6 = vector.load %arg9[%c0_5, %c0_6] : memref<64x128xf32, #tpu.memory_space<vmem>>, vector<64x128xf32>
    tpu.vector_store %arg9[%c0_5, %c0_6], %5 {strides = array<i32>} : memref<64x128xf32, #tpu.memory_space<vmem>>, vector<64x128xf32>,
    %c0_7 = arith.constant 0 : index
    %c0_8 = arith.constant 0 : index
    %7 = vector.load %arg2[%c0_7, %c0_8] : memref<32x128xf32, #tpu.memory_space<vmem>>, vector<32x128xf32>
    %cst_9 = arith.constant 0.000000e+00 : f32
    %8 = vector.broadcast %cst_9 : f32 to vector<8x32xf32>
    %cst_10 = arith.constant 0.000000e+00 : f32
    %9 = vector.broadcast %cst_10 : f32 to vector<8x32xf32>
    %c0_i32 = arith.constant 0 : i32
    %c8_i32 = arith.constant 8 : i32
    %10 = arith.muli %c0_i32, %c8_i32 : i32
    %11 = tpu.assume_multiple %10, 8 : i32
    %12 = arith.index_cast %11 : i32 to index
    %c0_11 = arith.constant 0 : index
    %13 = vector.load %arg9[%12, %c0_11] : memref<64x128xf32, #tpu.memory_space<vmem>>, vector<8x128xf32>
    %cst_12 = arith.constant dense<0.000000e+00> : vector<8x128xf32>
    %14 = tpu.matmul %8, %7, %cst_12 {dimension_numbers = #tpu.dot_dimension_numbers<[1], [0], [0], [1], [0, 0, 1, 1], [], []>} : vector<8x32xf32>, vector<32x128xf32>, vector<8x128xf32> -> vector<8x128xf32>
    %15 = arith.addf %13, %14 : vector<8x128xf32>
    %16 = arith.negf %15 : vector<8x128xf32>
    %17 = math.exp %16 : vector<8x128xf32>
    %cst_13 = arith.constant 1.000000e+00 : f32
    %18 = vector.broadcast %cst_13 : f32 to vector<8x128xf32>
    %19 = arith.addf %18, %17 : vector<8x128xf32>
    %20 = arith.divf %18, %19 : vector<8x128xf32>
    %21 = math.tanh %15 : vector<8x128xf32>
    %22 = vector.extract_strided_slice %20 {offsets = [0, 0], sizes = [8, 32], strides = [1, 1]} : vector<8x128xf32> to vector<8x32xf32>
    %23 = vector.extract_strided_slice %20 {offsets = [0, 32], sizes = [8, 32], strides = [1, 1]} : vector<8x128xf32> to vector<8x32xf32>
    %24 = vector.extract_strided_slice %21 {offsets = [0, 64], sizes = [8, 32], strides = [1, 1]} : vector<8x128xf32> to vector<8x32xf32>
    %25 = vector.extract_strided_slice %20 {offsets = [0, 96], sizes = [8, 32], strides = [1, 1]} : vector<8x128xf32> to vector<8x32xf32>
    %26 = arith.mulf %23, %9 : vector<8x32xf32>
    %27 = arith.mulf %22, %24 : vector<8x32xf32>
    %28 = arith.addf %26, %27 : vector<8x32xf32>
    %29 = math.tanh %28 : vector<8x32xf32>
    %30 = arith.mulf %25, %29 : vector<8x32xf32>
    %c1_i32 = arith.constant 1 : i32
    %c8_i32_14 = arith.constant 8 : i32
    %31 = arith.muli %c1_i32, %c8_i32_14 : i32
    %32 = tpu.assume_multiple %31, 8 : i32
    %33 = arith.index_cast %32 : i32 to index
    %c0_15 = arith.constant 0 : index
    %34 = vector.load %arg9[%33, %c0_15] : memref<64x128xf32, #tpu.memory_space<vmem>>, vector<8x128xf32>
    %cst_16 = arith.constant dense<0.000000e+00> : vector<8x128xf32>
    %35 = tpu.matmul %30, %7, %cst_16 {dimension_numbers = #tpu.dot_dimension_numbers<[1], [0], [0], [1], [0, 0, 1, 1], [], []>} : vector<8x32xf32>, vector<32x128xf32>, vector<8x128xf32> -> vector<8x128xf32>
    %36 = arith.addf %34, %35 : vector<8x128xf32>
    %37 = arith.negf %36 : vector<8x128xf32>
    %38 = math.exp %37 : vector<8x128xf32>
    %cst_17 = arith.constant 1.000000e+00 : f32
    %39 = vector.broadcast %cst_17 : f32 to vector<8x128xf32>
    %40 = arith.addf %39, %38 : vector<8x128xf32>
    %41 = arith.divf %39, %40 : vector<8x128xf32>
    %42 = math.tanh %36 : vector<8x128xf32>
    %43 = vector.extract_strided_slice %41 {offsets = [0, 0], sizes = [8, 32], strides = [1, 1]} : vector<8x128xf32> to vector<8x32xf32>
    %44 = vector.extract_strided_slice %41 {offsets = [0, 32], sizes = [8, 32], strides = [1, 1]} : vector<8x128xf32> to vector<8x32xf32>
    %45 = vector.extract_strided_slice %42 {offsets = [0, 64], sizes = [8, 32], strides = [1, 1]} : vector<8x128xf32> to vector<8x32xf32>
    %46 = vector.extract_strided_slice %41 {offsets = [0, 96], sizes = [8, 32], strides = [1, 1]} : vector<8x128xf32> to vector<8x32xf32>
    %47 = arith.mulf %44, %28 : vector<8x32xf32>
    %48 = arith.mulf %43, %45 : vector<8x32xf32>
    %49 = arith.addf %47, %48 : vector<8x32xf32>
    %50 = math.tanh %49 : vector<8x32xf32>
    %51 = arith.mulf %46, %50 : vector<8x32xf32>
    %c2_i32 = arith.constant 2 : i32
    %c8_i32_18 = arith.constant 8 : i32
    %52 = arith.muli %c2_i32, %c8_i32_18 : i32
    %53 = tpu.assume_multiple %52, 8 : i32
    %54 = arith.index_cast %53 : i32 to index
    %c0_19 = arith.constant 0 : index
    %55 = vector.load %arg9[%54, %c0_19] : memref<64x128xf32, #tpu.memory_space<vmem>>, vector<8x128xf32>
    %cst_20 = arith.constant dense<0.000000e+00> : vector<8x128xf32>
    %56 = tpu.matmul %51, %7, %cst_20 {dimension_numbers = #tpu.dot_dimension_numbers<[1], [0], [0], [1], [0, 0, 1, 1], [], []>} : vector<8x32xf32>, vector<32x128xf32>, vector<8x128xf32> -> vector<8x128xf32>
    %57 = arith.addf %55, %56 : vector<8x128xf32>
    %58 = arith.negf %57 : vector<8x128xf32>
    %59 = math.exp %58 : vector<8x128xf32>
    %cst_21 = arith.constant 1.000000e+00 : f32
    %60 = vector.broadcast %cst_21 : f32 to vector<8x128xf32>
    %61 = arith.addf %60, %59 : vector<8x128xf32>
    %62 = arith.divf %60, %61 : vector<8x128xf32>
    %63 = math.tanh %57 : vector<8x128xf32>
    %64 = vector.extract_strided_slice %62 {offsets = [0, 0], sizes = [8, 32], strides = [1, 1]} : vector<8x128xf32> to vector<8x32xf32>
    %65 = vector.extract_strided_slice %62 {offsets = [0, 32], sizes = [8, 32], strides = [1, 1]} : vector<8x128xf32> to vector<8x32xf32>
    %66 = vector.extract_strided_slice %63 {offsets = [0, 64], sizes = [8, 32], strides = [1, 1]} : vector<8x128xf32> to vector<8x32xf32>
    %67 = vector.extract_strided_slice %62 {offsets = [0, 96], sizes = [8, 32], strides = [1, 1]} : vector<8x128xf32> to vector<8x32xf32>
    %68 = arith.mulf %65, %49 : vector<8x32xf32>
    %69 = arith.mulf %64, %66 : vector<8x32xf32>
    %70 = arith.addf %68, %69 : vector<8x32xf32>
    %71 = math.tanh %70 : vector<8x32xf32>
    %72 = arith.mulf %67, %71 : vector<8x32xf32>
    %c3_i32 = arith.constant 3 : i32
    %c8_i32_22 = arith.constant 8 : i32
    %73 = arith.muli %c3_i32, %c8_i32_22 : i32
    %74 = tpu.assume_multiple %73, 8 : i32
    %75 = arith.index_cast %74 : i32 to index
    %c0_23 = arith.constant 0 : index
    %76 = vector.load %arg9[%75, %c0_23] : memref<64x128xf32, #tpu.memory_space<vmem>>, vector<8x128xf32>
    %cst_24 = arith.constant dense<0.000000e+00> : vector<8x128xf32>
    %77 = tpu.matmul %72, %7, %cst_24 {dimension_numbers = #tpu.dot_dimension_numbers<[1], [0], [0], [1], [0, 0, 1, 1], [], []>} : vector<8x32xf32>, vector<32x128xf32>, vector<8x128xf32> -> vector<8x128xf32>
    %78 = arith.addf %76, %77 : vector<8x128xf32>
    %79 = arith.negf %78 : vector<8x128xf32>
    %80 = math.exp %79 : vector<8x128xf32>
    %cst_25 = arith.constant 1.000000e+00 : f32
    %81 = vector.broadcast %cst_25 : f32 to vector<8x128xf32>
    %82 = arith.addf %81, %80 : vector<8x128xf32>
    %83 = arith.divf %81, %82 : vector<8x128xf32>
    %84 = math.tanh %78 : vector<8x128xf32>
    %85 = vector.extract_strided_slice %83 {offsets = [0, 0], sizes = [8, 32], strides = [1, 1]} : vector<8x128xf32> to vector<8x32xf32>
    %86 = vector.extract_strided_slice %83 {offsets = [0, 32], sizes = [8, 32], strides = [1, 1]} : vector<8x128xf32> to vector<8x32xf32>
    %87 = vector.extract_strided_slice %84 {offsets = [0, 64], sizes = [8, 32], strides = [1, 1]} : vector<8x128xf32> to vector<8x32xf32>
    %88 = vector.extract_strided_slice %83 {offsets = [0, 96], sizes = [8, 32], strides = [1, 1]} : vector<8x128xf32> to vector<8x32xf32>
    %89 = arith.mulf %86, %70 : vector<8x32xf32>
    %90 = arith.mulf %85, %87 : vector<8x32xf32>
    %91 = arith.addf %89, %90 : vector<8x32xf32>
    %92 = math.tanh %91 : vector<8x32xf32>
    %93 = arith.mulf %88, %92 : vector<8x32xf32>
    %c4_i32 = arith.constant 4 : i32
    %c8_i32_26 = arith.constant 8 : i32
    %94 = arith.muli %c4_i32, %c8_i32_26 : i32
    %95 = tpu.assume_multiple %94, 8 : i32
    %96 = arith.index_cast %95 : i32 to index
    %c0_27 = arith.constant 0 : index
    %97 = vector.load %arg9[%96, %c0_27] : memref<64x128xf32, #tpu.memory_space<vmem>>, vector<8x128xf32>
    %cst_28 = arith.constant dense<0.000000e+00> : vector<8x128xf32>
    %98 = tpu.matmul %93, %7, %cst_28 {dimension_numbers = #tpu.dot_dimension_numbers<[1], [0], [0], [1], [0, 0, 1, 1], [], []>} : vector<8x32xf32>, vector<32x128xf32>, vector<8x128xf32> -> vector<8x128xf32>
    %99 = arith.addf %97, %98 : vector<8x128xf32>
    %100 = arith.negf %99 : vector<8x128xf32>
    %101 = math.exp %100 : vector<8x128xf32>
    %cst_29 = arith.constant 1.000000e+00 : f32
    %102 = vector.broadcast %cst_29 : f32 to vector<8x128xf32>
    %103 = arith.addf %102, %101 : vector<8x128xf32>
    %104 = arith.divf %102, %103 : vector<8x128xf32>
    %105 = math.tanh %99 : vector<8x128xf32>
    %106 = vector.extract_strided_slice %104 {offsets = [0, 0], sizes = [8, 32], strides = [1, 1]} : vector<8x128xf32> to vector<8x32xf32>
    %107 = vector.extract_strided_slice %104 {offsets = [0, 32], sizes = [8, 32], strides = [1, 1]} : vector<8x128xf32> to vector<8x32xf32>
    %108 = vector.extract_strided_slice %105 {offsets = [0, 64], sizes = [8, 32], strides = [1, 1]} : vector<8x128xf32> to vector<8x32xf32>
    %109 = vector.extract_strided_slice %104 {offsets = [0, 96], sizes = [8, 32], strides = [1, 1]} : vector<8x128xf32> to vector<8x32xf32>
    %110 = arith.mulf %107, %91 : vector<8x32xf32>
    %111 = arith.mulf %106, %108 : vector<8x32xf32>
    %112 = arith.addf %110, %111 : vector<8x32xf32>
    %113 = math.tanh %112 : vector<8x32xf32>
    %114 = arith.mulf %109, %113 : vector<8x32xf32>
    %c5_i32 = arith.constant 5 : i32
    %c8_i32_30 = arith.constant 8 : i32
    %115 = arith.muli %c5_i32, %c8_i32_30 : i32
    %116 = tpu.assume_multiple %115, 8 : i32
    %117 = arith.index_cast %116 : i32 to index
    %c0_31 = arith.constant 0 : index
    %118 = vector.load %arg9[%117, %c0_31] : memref<64x128xf32, #tpu.memory_space<vmem>>, vector<8x128xf32>
    %cst_32 = arith.constant dense<0.000000e+00> : vector<8x128xf32>
    %119 = tpu.matmul %114, %7, %cst_32 {dimension_numbers = #tpu.dot_dimension_numbers<[1], [0], [0], [1], [0, 0, 1, 1], [], []>} : vector<8x32xf32>, vector<32x128xf32>, vector<8x128xf32> -> vector<8x128xf32>
    %120 = arith.addf %118, %119 : vector<8x128xf32>
    %121 = arith.negf %120 : vector<8x128xf32>
    %122 = math.exp %121 : vector<8x128xf32>
    %cst_33 = arith.constant 1.000000e+00 : f32
    %123 = vector.broadcast %cst_33 : f32 to vector<8x128xf32>
    %124 = arith.addf %123, %122 : vector<8x128xf32>
    %125 = arith.divf %123, %124 : vector<8x128xf32>
    %126 = math.tanh %120 : vector<8x128xf32>
    %127 = vector.extract_strided_slice %125 {offsets = [0, 0], sizes = [8, 32], strides = [1, 1]} : vector<8x128xf32> to vector<8x32xf32>
    %128 = vector.extract_strided_slice %125 {offsets = [0, 32], sizes = [8, 32], strides = [1, 1]} : vector<8x128xf32> to vector<8x32xf32>
    %129 = vector.extract_strided_slice %126 {offsets = [0, 64], sizes = [8, 32], strides = [1, 1]} : vector<8x128xf32> to vector<8x32xf32>
    %130 = vector.extract_strided_slice %125 {offsets = [0, 96], sizes = [8, 32], strides = [1, 1]} : vector<8x128xf32> to vector<8x32xf32>
    %131 = arith.mulf %128, %112 : vector<8x32xf32>
    %132 = arith.mulf %127, %129 : vector<8x32xf32>
    %133 = arith.addf %131, %132 : vector<8x32xf32>
    %134 = math.tanh %133 : vector<8x32xf32>
    %135 = arith.mulf %130, %134 : vector<8x32xf32>
    %c6_i32 = arith.constant 6 : i32
    %c8_i32_34 = arith.constant 8 : i32
    %136 = arith.muli %c6_i32, %c8_i32_34 : i32
    %137 = tpu.assume_multiple %136, 8 : i32
    %138 = arith.index_cast %137 : i32 to index
    %c0_35 = arith.constant 0 : index
    %139 = vector.load %arg9[%138, %c0_35] : memref<64x128xf32, #tpu.memory_space<vmem>>, vector<8x128xf32>
    %cst_36 = arith.constant dense<0.000000e+00> : vector<8x128xf32>
    %140 = tpu.matmul %135, %7, %cst_36 {dimension_numbers = #tpu.dot_dimension_numbers<[1], [0], [0], [1], [0, 0, 1, 1], [], []>} : vector<8x32xf32>, vector<32x128xf32>, vector<8x128xf32> -> vector<8x128xf32>
    %141 = arith.addf %139, %140 : vector<8x128xf32>
    %142 = arith.negf %141 : vector<8x128xf32>
    %143 = math.exp %142 : vector<8x128xf32>
    %cst_37 = arith.constant 1.000000e+00 : f32
    %144 = vector.broadcast %cst_37 : f32 to vector<8x128xf32>
    %145 = arith.addf %144, %143 : vector<8x128xf32>
    %146 = arith.divf %144, %145 : vector<8x128xf32>
    %147 = math.tanh %141 : vector<8x128xf32>
    %148 = vector.extract_strided_slice %146 {offsets = [0, 0], sizes = [8, 32], strides = [1, 1]} : vector<8x128xf32> to vector<8x32xf32>
    %149 = vector.extract_strided_slice %146 {offsets = [0, 32], sizes = [8, 32], strides = [1, 1]} : vector<8x128xf32> to vector<8x32xf32>
    %150 = vector.extract_strided_slice %147 {offsets = [0, 64], sizes = [8, 32], strides = [1, 1]} : vector<8x128xf32> to vector<8x32xf32>
    %151 = vector.extract_strided_slice %146 {offsets = [0, 96], sizes = [8, 32], strides = [1, 1]} : vector<8x128xf32> to vector<8x32xf32>
    %152 = arith.mulf %149, %133 : vector<8x32xf32>
    %153 = arith.mulf %148, %150 : vector<8x32xf32>
    %154 = arith.addf %152, %153 : vector<8x32xf32>
    %155 = math.tanh %154 : vector<8x32xf32>
    %156 = arith.mulf %151, %155 : vector<8x32xf32>
    %c7_i32 = arith.constant 7 : i32
    %c8_i32_38 = arith.constant 8 : i32
    %157 = arith.muli %c7_i32, %c8_i32_38 : i32
    %158 = tpu.assume_multiple %157, 8 : i32
    %159 = arith.index_cast %158 : i32 to index
    %c0_39 = arith.constant 0 : index
    %160 = vector.load %arg9[%159, %c0_39] : memref<64x128xf32, #tpu.memory_space<vmem>>, vector<8x128xf32>
    %cst_40 = arith.constant dense<0.000000e+00> : vector<8x128xf32>
    %161 = tpu.matmul %156, %7, %cst_40 {dimension_numbers = #tpu.dot_dimension_numbers<[1], [0], [0], [1], [0, 0, 1, 1], [], []>} : vector<8x32xf32>, vector<32x128xf32>, vector<8x128xf32> -> vector<8x128xf32>
    %162 = arith.addf %160, %161 : vector<8x128xf32>
    %163 = arith.negf %162 : vector<8x128xf32>
    %164 = math.exp %163 : vector<8x128xf32>
    %cst_41 = arith.constant 1.000000e+00 : f32
    %165 = vector.broadcast %cst_41 : f32 to vector<8x128xf32>
    %166 = arith.addf %165, %164 : vector<8x128xf32>
    %167 = arith.divf %165, %166 : vector<8x128xf32>
    %168 = math.tanh %162 : vector<8x128xf32>
    %169 = vector.extract_strided_slice %167 {offsets = [0, 0], sizes = [8, 32], strides = [1, 1]} : vector<8x128xf32> to vector<8x32xf32>
    %170 = vector.extract_strided_slice %167 {offsets = [0, 32], sizes = [8, 32], strides = [1, 1]} : vector<8x128xf32> to vector<8x32xf32>
    %171 = vector.extract_strided_slice %168 {offsets = [0, 64], sizes = [8, 32], strides = [1, 1]} : vector<8x128xf32> to vector<8x32xf32>
    %172 = vector.extract_strided_slice %167 {offsets = [0, 96], sizes = [8, 32], strides = [1, 1]} : vector<8x128xf32> to vector<8x32xf32>
    %173 = arith.mulf %170, %154 : vector<8x32xf32>
    %174 = arith.mulf %169, %171 : vector<8x32xf32>
    %175 = arith.addf %173, %174 : vector<8x32xf32>
    %176 = math.tanh %175 : vector<8x32xf32>
    %177 = arith.mulf %172, %176 : vector<8x32xf32>
    %c8_i32_42 = arith.constant 8 : i32
    %c0_43 = arith.constant 0 : index
    %c0_44 = arith.constant 0 : index
    %178 = vector.load %arg4[%c0_43, %c0_44] : memref<32x32xf32, #tpu.memory_space<vmem>>, vector<32x32xf32>
    %cst_45 = arith.constant dense<0.000000e+00> : vector<8x32xf32>
    %179 = tpu.matmul %177, %178, %cst_45 {dimension_numbers = #tpu.dot_dimension_numbers<[1], [0], [0], [1], [0, 0, 1, 1], [], []>} : vector<8x32xf32>, vector<32x32xf32>, vector<8x32xf32> -> vector<8x32xf32>
    %c0_46 = arith.constant 0 : index
    %c0_47 = arith.constant 0 : index
    %180 = vector.load %arg5[%c0_46, %c0_47] : memref<1x32xf32, #tpu.memory_space<vmem>>, vector<1x32xf32>
    %181 = vector.broadcast %180 : vector<1x32xf32> to vector<8x32xf32>
    %182 = arith.addf %179, %181 : vector<8x32xf32>
    %cst_48 = arith.constant 0.000000e+00 : f32
    %183 = vector.broadcast %cst_48 : f32 to vector<8x32xf32>
    %184 = arith.maximumf %182, %183 : vector<8x32xf32>
    %c0_49 = arith.constant 0 : index
    %c0_50 = arith.constant 0 : index
    %185 = vector.load %arg6[%c0_49, %c0_50] : memref<32x1xf32, #tpu.memory_space<vmem>>, vector<32x1xf32>
    %cst_51 = arith.constant dense<0.000000e+00> : vector<8x1xf32>
    %186 = tpu.matmul %184, %185, %cst_51 {dimension_numbers = #tpu.dot_dimension_numbers<[1], [0], [0], [1], [0, 0, 1, 1], [], []>} : vector<8x32xf32>, vector<32x1xf32>, vector<8x1xf32> -> vector<8x1xf32>
    %c0_52 = arith.constant 0 : index
    %c0_53 = arith.constant 0 : index
    %187 = vector.load %arg7[%c0_52, %c0_53] : memref<1x1xf32, #tpu.memory_space<vmem>>, vector<1x1xf32>
    %188 = vector.broadcast %187 : vector<1x1xf32> to vector<8x1xf32>
    %189 = arith.addf %186, %188 : vector<8x1xf32>
    %c0_54 = arith.constant 0 : index
    %c0_55 = arith.constant 0 : index
    %190 = vector.load %arg8[%c0_54, %c0_55] : memref<8x1xf32, #tpu.memory_space<vmem>>, vector<8x1xf32>
    tpu.vector_store %arg8[%c0_54, %c0_55], %189 {strides = array<i32>} : memref<8x1xf32, #tpu.memory_space<vmem>>, vector<8x1xf32>,
    return
  }
}

</mosaic_0001>

<llo_original>
// kernel: tpu_custom_call.1
$region0: #{tpu_custom_call.1}
  #allocation0 [shape = 'u32[]', space=smem, size = 0x4, offset = 0x4, fixed_abs, tag = 'smem constant byte address 0x4 - core index']
  #allocation1 [shape = 'u32[72,128]{1,0:T(1,128)}', space=vmem, size = 0x9000, scoped, tag = 'internal scratch']
  #allocation2 [shape = 'f32[64,128]{1,0:T(8,128)}', space=vmem, size = 0x8000, scoped, tag = 'scratch operand']
  #allocation3 [shape = 'f32[1,1]{1,0:T(1,128)S(1)}', space=vmem, size = 0x200, scoped, tag = 'scoped memory for tpu_custom_call.1']
  %s0 = inlined_call_operand.vmem [shape: f32[64,4], index: 0, kind: input, shape index: {}]
  %s1 = inlined_call_operand.vmem [shape: f32[4,128], index: 1, kind: input, shape index: {}]
  %s2 = inlined_call_operand.vmem [shape: f32[32,128], index: 2, kind: input, shape index: {}]
  %s3 = inlined_call_operand.vmem [shape: f32[1,128], index: 3, kind: input, shape index: {}]
  %s4 = inlined_call_operand.vmem [shape: f32[32,32], index: 4, kind: input, shape index: {}]
  %s5 = inlined_call_operand.vmem [shape: f32[1,32], index: 5, kind: input, shape index: {}]
  %s6 = inlined_call_operand.vmem [shape: f32[32,1], index: 6, kind: input, shape index: {}]
  %s7 = inlined_call_operand.<no memory space> [shape: f32[1,1], index: 7, kind: input, shape index: {}]
  %s8 = inlined_call_operand.vmem [shape: f32[8,1], index: 8, kind: output, shape index: {}]
  %s9 = sld [smem:[#allocation0]]
  $region42: #{tpu_custom_call.1} parent=0
    _
  %s11 = ssub.s32 1, %s9
  %s12 = scalar_select 0, %s11, %s9
  %v13 = vstv %s7
  %14 = vst [vmem:[#allocation3] sm:$0x1] %v13
  // Predicated region
  $region2: #{tpu_custom_call.1} parent=0 // pred_check
    _
  $region3: #{tpu_custom_call.1} parent=0 // pred_check_branch
    %16 = sbr.rel (0) target = $region5
  $region4: #{tpu_custom_call.1} parent=0 // pred_region
    _
  $region5: #{tpu_custom_call.1} parent=0 // pred_fallthru
    _
  // Predicated region
  $region6: #{tpu_custom_call.1} parent=0 // pred_check
    _
  $region7: #{tpu_custom_call.1} parent=0 // pred_check_branch
    %18 = sbr.rel (0) target = $region9
  $region8: #{tpu_custom_call.1} parent=0 // pred_region
    _
  $region9: #{tpu_custom_call.1} parent=0 // pred_fallthru
    _
  // Predicated region
  $region10: #{tpu_custom_call.1} parent=0 // pred_check
    _
  $region11: #{tpu_custom_call.1} parent=0 // pred_check_branch
    %20 = sbr.rel (0) target = $region13
  $region12: #{tpu_custom_call.1} parent=0 // pred_region
    _
  $region13: #{tpu_custom_call.1} parent=0 // pred_fallthru
    _
  // Predicated region
  $region14: #{tpu_custom_call.1} parent=0 // pred_check
    _
  $region15: #{tpu_custom_call.1} parent=0 // pred_check_branch
    %22 = sbr.rel (0) target = $region17
  $region16: #{tpu_custom_call.1} parent=0 // pred_region
    _
  $region17: #{tpu_custom_call.1} parent=0 // pred_fallthru
    _
  // Predicated region
  $region18: #{tpu_custom_call.1} parent=0 // pred_check
    _
  $region19: #{tpu_custom_call.1} parent=0 // pred_check_branch
    %24 = sbr.rel (0) target = $region21
  $region20: #{tpu_custom_call.1} parent=0 // pred_region
    _
  $region21: #{tpu_custom_call.1} parent=0 // pred_fallthru
    _
  // Predicated region
  $region22: #{tpu_custom_call.1} parent=0 // pred_check
    _
  $region23: #{tpu_custom_call.1} parent=0 // pred_check_branch
    %26 = sbr.rel (0) target = $region25
  $region24: #{tpu_custom_call.1} parent=0 // pred_region
    _
  $region25: #{tpu_custom_call.1} parent=0 // pred_fallthru
    _
  // Predicated region
  $region26: #{tpu_custom_call.1} parent=0 // pred_check
    _
  $region27: #{tpu_custom_call.1} parent=0 // pred_check_branch
    %28 = sbr.rel (0) target = $region29
  $region28: #{tpu_custom_call.1} parent=0 // pred_region
    _
  $region29: #{tpu_custom_call.1} parent=0 // pred_fallthru
    _
  // Predicated region
  $region30: #{tpu_custom_call.1} parent=0 // pred_check
    _
  $region31: #{tpu_custom_call.1} parent=0 // pred_check_branch
    %30 = sbr.rel (0) target = $region33
  $region32: #{tpu_custom_call.1} parent=0 // pred_region
    _
  $region33: #{tpu_custom_call.1} parent=0 // pred_fallthru
    _
  %v31 = vld [vmem:[%s0] sm:$0xff]
  %v32 = vld [vmem:[%s0 + $0x8] sm:$0xff]
  %v33 = vld [vmem:[%s0 + $0x10] sm:$0xff]
  %v34 = vld [vmem:[%s0 + $0x18] sm:$0xff]
  %v35 = vld [vmem:[%s0 + $0x20] sm:$0xff]
  %v36 = vld [vmem:[%s0 + $0x28] sm:$0xff]
  %v37 = vld [vmem:[%s0 + $0x30] sm:$0xff]
  %v38 = vld [vmem:[%s0 + $0x38] sm:$0xff]
  %v39 = vld [vmem:[%s1] sm:$0xf]
  %v40 = vld [vmem:[%s3] sm:$0x1]
  %v42 = vperm.slane %v40, 0
  %vm44 = vcmask 31744
  %v46 = vsel %vm44, %v31, 0
  %v49 = vsel %vm44, %v32, 0
  %v52 = vsel %vm44, %v33, 0
  %v55 = vsel %vm44, %v34, 0
  %v58 = vsel %vm44, %v35, 0
  %v61 = vsel %vm44, %v36, 0
  %v64 = vsel %vm44, %v37, 0
  %v67 = vsel %vm44, %v38, 0
  %vm69 = vcmask 1043456
  %v71 = vsel %vm69, %v39, 0
  %73 = vmatpush.msra.mxu0 0.0
  %74 = vmatpush.msra.mxu0 0.0
  %75 = vmatpush.msra.mxu0 0.0
  %76 = vmatpush.msra.mxu0 0.0
  %77 = vmatpush.msra.mxu0 0.0
  %78 = vmatpush.msra.mxu0 0.0
  %79 = vmatpush.msra.mxu0 0.0
  %80 = vmatpush.msra.mxu0 0.0
  %81 = vmatpush.msra.mxu0 0.0
  %82 = vmatpush.msra.mxu0 0.0
  %83 = vmatpush.msra.mxu0 0.0
  %84 = vmatpush.msra.mxu0 0.0
  %85 = vmatpush.msra.mxu0 0.0
  %86 = vmatpush.msra.mxu0 0.0
  %87 = vmatpush.msra.mxu0 0.0
  %88 = vmatpush.msra.mxu0 %v71
  %89 = vmatmul.f32.gmra.mxu0 %v46
  %v90 = vpop.f32.mrf.mxu0
  %v91 = vadd.f32 %v42, %v90
  %92 = vmatmul.f32.gmra.mxu0 %v49
  %v93 = vpop.f32.mrf.mxu0
  %v94 = vadd.f32 %v42, %v93
  %95 = vmatmul.f32.gmra.mxu0 %v52
  %v96 = vpop.f32.mrf.mxu0
  %v97 = vadd.f32 %v42, %v96
  %98 = vmatmul.f32.gmra.mxu0 %v55
  %v99 = vpop.f32.mrf.mxu0
  %v100 = vadd.f32 %v42, %v99
  %101 = vmatmul.f32.gmra.mxu0 %v58
  %v102 = vpop.f32.mrf.mxu0
  %v103 = vadd.f32 %v42, %v102
  %104 = vmatmul.f32.gmra.mxu0 %v61
  %v105 = vpop.f32.mrf.mxu0
  %v106 = vadd.f32 %v42, %v105
  %107 = vmatmul.f32.gmra.mxu0 %v64
  %v108 = vpop.f32.mrf.mxu0
  %v109 = vadd.f32 %v42, %v108
  %110 = vmatmul.f32.gmra.mxu0 %v67
  %v111 = vpop.f32.mrf.mxu0
  %v112 = vadd.f32 %v42, %v111
  %113 = vdwg.mxu0
  %114 = vst [vmem:[#allocation2] sm:$0xff] %v91
  %115 = vst [vmem:[#allocation2 + $0x8] sm:$0xff] %v94
  %116 = vst [vmem:[#allocation2 + $0x10] sm:$0xff] %v97
  %117 = vst [vmem:[#allocation2 + $0x18] sm:$0xff] %v100
  %118 = vst [vmem:[#allocation2 + $0x20] sm:$0xff] %v103
  %119 = vst [vmem:[#allocation2 + $0x28] sm:$0xff] %v106
  %120 = vst [vmem:[#allocation2 + $0x30] sm:$0xff] %v109
  %121 = vst [vmem:[#allocation2 + $0x38] sm:$0xff] %v112
  %v122 = vld [vmem:[%s2] sm:$0xff]
  %v123 = vld [vmem:[%s2 + $0x8] sm:$0xff]
  %v124 = vld [vmem:[%s2 + $0x10] sm:$0xff]
  %v125 = vld [vmem:[%s2 + $0x18] sm:$0xff]
  %v126 = vld [vmem:[#allocation2] sm:$0xff]
  %vm127 = vcmask 261120
  %v129 = vsel %vm127, 0.0, 0
  %131 = vmatpush.msra.mxu0 0.0
  %132 = vmatpush.msra.mxu0 0.0
  %133 = vmatpush.msra.mxu0 0.0
  %134 = vmatpush.msra.mxu0 0.0
  %135 = vmatpush.msra.mxu0 0.0
  %136 = vmatpush.msra.mxu0 0.0
  %137 = vmatpush.msra.mxu0 0.0
  %138 = vmatpush.msra.mxu0 0.0
  %139 = vmatpush.msra.mxu0 0.0
  %140 = vmatpush.msra.mxu0 0.0
  %141 = vmatpush.msra.mxu0 0.0
  %142 = vmatpush.msra.mxu0 0.0
  %143 = vmatpush.msra.mxu0 %v125
  %144 = vmatpush.msra.mxu0 %v124
  %145 = vmatpush.msra.mxu0 %v123
  %146 = vmatpush.msra.mxu0 %v122
  %147 = vmatmul.f32.gmra.mxu0 %v129
  %v148 = vpop.f32.mrf.mxu0
  %v149 = vadd.f32 0.0, %v148
  %150 = vdwg.mxu0
  %v151 = vadd.f32 %v126, %v149
  %v152 = vxor.u32 %v151, 2147483648
  %v153 = vmul.f32 %v152, 1.442695
  %v154 = vpow.pop %v153
  %v155 = vadd.f32 %v154, 1.0
  %v156 = vrcp.pop %v155
  %v157 = vmul.f32 %v155, %v156
  %v158 = vsub.f32 1.0, %v157
  %v159 = vmul.f32 %v156, %v158
  %v160 = vadd.f32 %v156, %v159
  %vm161 = vweird.f32 %v155
  %vm162 = vweird.f32 %v156
  %vm163 = vmor %vm161, %vm162
  %v164 = vsel %vm163, %v156, %v160
  %v165 = vand.u32 2147483647, %v155
  %vm166 = vcmp.eq.f32.partialorder %v165, 8.507059e+37
  %v167 = vand.u32 %v155, 2147483648
  %v168 = vor.u32 1.1754944e-38, %v167
  %v169 = vsel %vm166, %v168, %v164
  %v170 = vmul.f32 1.0, %v169
  %v171 = vtanh.pop %v151
  %v172 = vmul.f32 %v170, 0.0
  %174 = vrot.lane.b32.xlu0 %v171, 64
  %v175 = vpop.permute.xlu0 %174
  %v177 = vmul.f32 %v170, %v175
  %179 = vrot.lane.b32.xlu0 %v177, 32
  %v180 = vpop.permute.xlu0 %179
  %v182 = vadd.f32 %v172, %v180
  %v183 = vtanh.pop %v182
  %185 = vrot.lane.b32.xlu0 %v183, 64
  %v186 = vpop.permute.xlu0 %185
  %v188 = vmul.f32 %v170, %v186
  %s189 = scalar_lea.vmem [#allocation2], 8
  %v190 = vld [vmem:[%s189] sm:$0xff]
  %192 = vrot.lane.b32.xlu0 %v188, 32
  %v193 = vpop.permute.xlu0 %192
  %v194 = vsel %vm127, %v193, 0
  %196 = vmatpush.msra.mxu0 0.0
  %197 = vmatpush.msra.mxu0 0.0
  %198 = vmatpush.msra.mxu0 0.0
  %199 = vmatpush.msra.mxu0 0.0
  %200 = vmatpush.msra.mxu0 0.0
  %201 = vmatpush.msra.mxu0 0.0
  %202 = vmatpush.msra.mxu0 0.0
  %203 = vmatpush.msra.mxu0 0.0
  %204 = vmatpush.msra.mxu0 0.0
  %205 = vmatpush.msra.mxu0 0.0
  %206 = vmatpush.msra.mxu0 0.0
  %207 = vmatpush.msra.mxu0 0.0
  %208 = vmatpush.msra.mxu0 %v125
  %209 = vmatpush.msra.mxu0 %v124
  %210 = vmatpush.msra.mxu0 %v123
  %211 = vmatpush.msra.mxu0 %v122
  %212 = vmatmul.f32.gmra.mxu0 %v194
  %v213 = vpop.f32.mrf.mxu0
  %v214 = vadd.f32 0.0, %v213
  %215 = vdwg.mxu0
  %v216 = vadd.f32 %v190, %v214
  %v217 = vxor.u32 %v216, 2147483648
  %v218 = vmul.f32 %v217, 1.442695
  %v219 = vpow.pop %v218
  %v220 = vadd.f32 %v219, 1.0
  %v221 = vrcp.pop %v220
  %v222 = vmul.f32 %v220, %v221
  %v223 = vsub.f32 1.0, %v222
  %v224 = vmul.f32 %v221, %v223
  %v225 = vadd.f32 %v221, %v224
  %vm226 = vweird.f32 %v220
  %vm227 = vweird.f32 %v221
  %vm228 = vmor %vm226, %vm227
  %v229 = vsel %vm228, %v221, %v225
  %v230 = vand.u32 2147483647, %v220
  %vm231 = vcmp.eq.f32.partialorder %v230, 8.507059e+37
  %v232 = vand.u32 %v220, 2147483648
  %v233 = vor.u32 1.1754944e-38, %v232
  %v234 = vsel %vm231, %v233, %v229
  %v235 = vmul.f32 1.0, %v234
  %v236 = vtanh.pop %v216
  %v237 = vmul.f32 %v235, %v182
  %239 = vrot.lane.b32.xlu0 %v236, 64
  %v240 = vpop.permute.xlu0 %239
  %v242 = vmul.f32 %v235, %v240
  %244 = vrot.lane.b32.xlu0 %v242, 32
  %v245 = vpop.permute.xlu0 %244
  %v247 = vadd.f32 %v237, %v245
  %v248 = vtanh.pop %v247
  %250 = vrot.lane.b32.xlu0 %v248, 64
  %v251 = vpop.permute.xlu0 %250
  %v253 = vmul.f32 %v235, %v251
  %s254 = scalar_lea.vmem [#allocation2], 16
  %v255 = vld [vmem:[%s254] sm:$0xff]
  %257 = vrot.lane.b32.xlu0 %v253, 32
  %v258 = vpop.permute.xlu0 %257
  %v259 = vsel %vm127, %v258, 0
  %261 = vmatpush.msra.mxu0 0.0
  %262 = vmatpush.msra.mxu0 0.0
  %263 = vmatpush.msra.mxu0 0.0
  %264 = vmatpush.msra.mxu0 0.0
  %265 = vmatpush.msra.mxu0 0.0
  %266 = vmatpush.msra.mxu0 0.0
  %267 = vmatpush.msra.mxu0 0.0
  %268 = vmatpush.msra.mxu0 0.0
  %269 = vmatpush.msra.mxu0 0.0
  %270 = vmatpush.msra.mxu0 0.0
  %271 = vmatpush.msra.mxu0 0.0
  %272 = vmatpush.msra.mxu0 0.0
  %273 = vmatpush.msra.mxu0 %v125
  %274 = vmatpush.msra.mxu0 %v124
  %275 = vmatpush.msra.mxu0 %v123
  %276 = vmatpush.msra.mxu0 %v122
  %277 = vmatmul.f32.gmra.mxu0 %v259
  %v278 = vpop.f32.mrf.mxu0
  %v279 = vadd.f32 0.0, %v278
  %280 = vdwg.mxu0
  %v281 = vadd.f32 %v255, %v279
  %v282 = vxor.u32 %v281, 2147483648
  %v283 = vmul.f32 %v282, 1.442695
  %v284 = vpow.pop %v283
  %v285 = vadd.f32 %v284, 1.0
  %v286 = vrcp.pop %v285
  %v287 = vmul.f32 %v285, %v286
  %v288 = vsub.f32 1.0, %v287
  %v289 = vmul.f32 %v286, %v288
  %v290 = vadd.f32 %v286, %v289
  %vm291 = vweird.f32 %v285
  %vm292 = vweird.f32 %v286
  %vm293 = vmor %vm291, %vm292
  %v294 = vsel %vm293, %v286, %v290
  %v295 = vand.u32 2147483647, %v285
  %vm296 = vcmp.eq.f32.partialorder %v295, 8.507059e+37
  %v297 = vand.u32 %v285, 2147483648
  %v298 = vor.u32 1.1754944e-38, %v297
  %v299 = vsel %vm296, %v298, %v294
  %v300 = vmul.f32 1.0, %v299
  %v301 = vtanh.pop %v281
  %v302 = vmul.f32 %v300, %v247
  %304 = vrot.lane.b32.xlu0 %v301, 64
  %v305 = vpop.permute.xlu0 %304
  %v307 = vmul.f32 %v300, %v305
  %309 = vrot.lane.b32.xlu0 %v307, 32
  %v310 = vpop.permute.xlu0 %309
  %v312 = vadd.f32 %v302, %v310
  %v313 = vtanh.pop %v312
  %315 = vrot.lane.b32.xlu0 %v313, 64
  %v316 = vpop.permute.xlu0 %315
  %v318 = vmul.f32 %v300, %v316
  %s319 = scalar_lea.vmem [#allocation2], 24
  %v320 = vld [vmem:[%s319] sm:$0xff]
  %322 = vrot.lane.b32.xlu0 %v318, 32
  %v323 = vpop.permute.xlu0 %322
  %v324 = vsel %vm127, %v323, 0
  %326 = vmatpush.msra.mxu0 0.0
  %327 = vmatpush.msra.mxu0 0.0
  %328 = vmatpush.msra.mxu0 0.0
  %329 = vmatpush.msra.mxu0 0.0
  %330 = vmatpush.msra.mxu0 0.0
  %331 = vmatpush.msra.mxu0 0.0
  %332 = vmatpush.msra.mxu0 0.0
  %333 = vmatpush.msra.mxu0 0.0
  %334 = vmatpush.msra.mxu0 0.0
  %335 = vmatpush.msra.mxu0 0.0
  %336 = vmatpush.msra.mxu0 0.0
  %337 = vmatpush.msra.mxu0 0.0
  %338 = vmatpush.msra.mxu0 %v125
  %339 = vmatpush.msra.mxu0 %v124
  %340 = vmatpush.msra.mxu0 %v123
  %341 = vmatpush.msra.mxu0 %v122
  %342 = vmatmul.f32.gmra.mxu0 %v324
  %v343 = vpop.f32.mrf.mxu0
  %v344 = vadd.f32 0.0, %v343
  %345 = vdwg.mxu0
  %v346 = vadd.f32 %v320, %v344
  %v347 = vxor.u32 %v346, 2147483648
  %v348 = vmul.f32 %v347, 1.442695
  %v349 = vpow.pop %v348
  %v350 = vadd.f32 %v349, 1.0
  %v351 = vrcp.pop %v350
  %v352 = vmul.f32 %v350, %v351
  %v353 = vsub.f32 1.0, %v352
  %v354 = vmul.f32 %v351, %v353
  %v355 = vadd.f32 %v351, %v354
  %vm356 = vweird.f32 %v350
  %vm357 = vweird.f32 %v351
  %vm358 = vmor %vm356, %vm357
  %v359 = vsel %vm358, %v351, %v355
  %v360 = vand.u32 2147483647, %v350
  %vm361 = vcmp.eq.f32.partialorder %v360, 8.507059e+37
  %v362 = vand.u32 %v350, 2147483648
  %v363 = vor.u32 1.1754944e-38, %v362
  %v364 = vsel %vm361, %v363, %v359
  %v365 = vmul.f32 1.0, %v364
  %v366 = vtanh.pop %v346
  %v367 = vmul.f32 %v365, %v312
  %369 = vrot.lane.b32.xlu0 %v366, 64
  %v370 = vpop.permute.xlu0 %369
  %v372 = vmul.f32 %v365, %v370
  %374 = vrot.lane.b32.xlu0 %v372, 32
  %v375 = vpop.permute.xlu0 %374
  %v377 = vadd.f32 %v367, %v375
  %v378 = vtanh.pop %v377
  %380 = vrot.lane.b32.xlu0 %v378, 64
  %v381 = vpop.permute.xlu0 %380
  %v383 = vmul.f32 %v365, %v381
  %s384 = scalar_lea.vmem [#allocation2], 32
  %v385 = vld [vmem:[%s384] sm:$0xff]
  %387 = vrot.lane.b32.xlu0 %v383, 32
  %v388 = vpop.permute.xlu0 %387
  %v389 = vsel %vm127, %v388, 0
  %391 = vmatpush.msra.mxu0 0.0
  %392 = vmatpush.msra.mxu0 0.0
  %393 = vmatpush.msra.mxu0 0.0
  %394 = vmatpush.msra.mxu0 0.0
  %395 = vmatpush.msra.mxu0 0.0
  %396 = vmatpush.msra.mxu0 0.0
  %397 = vmatpush.msra.mxu0 0.0
  %398 = vmatpush.msra.mxu0 0.0
  %399 = vmatpush.msra.mxu0 0.0
  %400 = vmatpush.msra.mxu0 0.0
  %401 = vmatpush.msra.mxu0 0.0
  %402 = vmatpush.msra.mxu0 0.0
  %403 = vmatpush.msra.mxu0 %v125
  %404 = vmatpush.msra.mxu0 %v124
  %405 = vmatpush.msra.mxu0 %v123
  %406 = vmatpush.msra.mxu0 %v122
  %407 = vmatmul.f32.gmra.mxu0 %v389
  %v408 = vpop.f32.mrf.mxu0
  %v409 = vadd.f32 0.0, %v408
  %410 = vdwg.mxu0
  %v411 = vadd.f32 %v385, %v409
  %v412 = vxor.u32 %v411, 2147483648
  %v413 = vmul.f32 %v412, 1.442695
  %v414 = vpow.pop %v413
  %v415 = vadd.f32 %v414, 1.0
  %v416 = vrcp.pop %v415
  %v417 = vmul.f32 %v415, %v416
  %v418 = vsub.f32 1.0, %v417
  %v419 = vmul.f32 %v416, %v418
  %v420 = vadd.f32 %v416, %v419
  %vm421 = vweird.f32 %v415
  %vm422 = vweird.f32 %v416
  %vm423 = vmor %vm421, %vm422
  %v424 = vsel %vm423, %v416, %v420
  %v425 = vand.u32 2147483647, %v415
  %vm426 = vcmp.eq.f32.partialorder %v425, 8.507059e+37
  %v427 = vand.u32 %v415, 2147483648
  %v428 = vor.u32 1.1754944e-38, %v427
  %v429 = vsel %vm426, %v428, %v424
  %v430 = vmul.f32 1.0, %v429
  %v431 = vtanh.pop %v411
  %v432 = vmul.f32 %v430, %v377
  %434 = vrot.lane.b32.xlu0 %v431, 64
  %v435 = vpop.permute.xlu0 %434
  %v437 = vmul.f32 %v430, %v435
  %439 = vrot.lane.b32.xlu0 %v437, 32
  %v440 = vpop.permute.xlu0 %439
  %v442 = vadd.f32 %v432, %v440
  %v443 = vtanh.pop %v442
  %445 = vrot.lane.b32.xlu0 %v443, 64
  %v446 = vpop.permute.xlu0 %445
  %v448 = vmul.f32 %v430, %v446
  %s449 = scalar_lea.vmem [#allocation2], 40
  %v450 = vld [vmem:[%s449] sm:$0xff]
  %452 = vrot.lane.b32.xlu0 %v448, 32
  %v453 = vpop.permute.xlu0 %452
  %v454 = vsel %vm127, %v453, 0
  %456 = vmatpush.msra.mxu0 0.0
  %457 = vmatpush.msra.mxu0 0.0
  %458 = vmatpush.msra.mxu0 0.0
  %459 = vmatpush.msra.mxu0 0.0
  %460 = vmatpush.msra.mxu0 0.0
  %461 = vmatpush.msra.mxu0 0.0
  %462 = vmatpush.msra.mxu0 0.0
  %463 = vmatpush.msra.mxu0 0.0
  %464 = vmatpush.msra.mxu0 0.0
  %465 = vmatpush.msra.mxu0 0.0
  %466 = vmatpush.msra.mxu0 0.0
  %467 = vmatpush.msra.mxu0 0.0
  %468 = vmatpush.msra.mxu0 %v125
  %469 = vmatpush.msra.mxu0 %v124
  %470 = vmatpush.msra.mxu0 %v123
  %471 = vmatpush.msra.mxu0 %v122
  %472 = vmatmul.f32.gmra.mxu0 %v454
  %v473 = vpop.f32.mrf.mxu0
  %v474 = vadd.f32 0.0, %v473
  %475 = vdwg.mxu0
  %v476 = vadd.f32 %v450, %v474
  %v477 = vxor.u32 %v476, 2147483648
  %v478 = vmul.f32 %v477, 1.442695
  %v479 = vpow.pop %v478
  %v480 = vadd.f32 %v479, 1.0
  %v481 = vrcp.pop %v480
  %v482 = vmul.f32 %v480, %v481
  %v483 = vsub.f32 1.0, %v482
  %v484 = vmul.f32 %v481, %v483
  %v485 = vadd.f32 %v481, %v484
  %vm486 = vweird.f32 %v480
  %vm487 = vweird.f32 %v481
  %vm488 = vmor %vm486, %vm487
  %v489 = vsel %vm488, %v481, %v485
  %v490 = vand.u32 2147483647, %v480
  %vm491 = vcmp.eq.f32.partialorder %v490, 8.507059e+37
  %v492 = vand.u32 %v480, 2147483648
  %v493 = vor.u32 1.1754944e-38, %v492
  %v494 = vsel %vm491, %v493, %v489
  %v495 = vmul.f32 1.0, %v494
  %v496 = vtanh.pop %v476
  %v497 = vmul.f32 %v495, %v442
  %499 = vrot.lane.b32.xlu0 %v496, 64
  %v500 = vpop.permute.xlu0 %499
  %v502 = vmul.f32 %v495, %v500
  %504 = vrot.lane.b32.xlu0 %v502, 32
  %v505 = vpop.permute.xlu0 %504
  %v507 = vadd.f32 %v497, %v505
  %v508 = vtanh.pop %v507
  %510 = vrot.lane.b32.xlu0 %v508, 64
  %v511 = vpop.permute.xlu0 %510
  %v513 = vmul.f32 %v495, %v511
  %s514 = scalar_lea.vmem [#allocation2], 48
  %v515 = vld [vmem:[%s514] sm:$0xff]
  %517 = vrot.lane.b32.xlu0 %v513, 32
  %v518 = vpop.permute.xlu0 %517
  %v519 = vsel %vm127, %v518, 0
  %521 = vmatpush.msra.mxu0 0.0
  %522 = vmatpush.msra.mxu0 0.0
  %523 = vmatpush.msra.mxu0 0.0
  %524 = vmatpush.msra.mxu0 0.0
  %525 = vmatpush.msra.mxu0 0.0
  %526 = vmatpush.msra.mxu0 0.0
  %527 = vmatpush.msra.mxu0 0.0
  %528 = vmatpush.msra.mxu0 0.0
  %529 = vmatpush.msra.mxu0 0.0
  %530 = vmatpush.msra.mxu0 0.0
  %531 = vmatpush.msra.mxu0 0.0
  %532 = vmatpush.msra.mxu0 0.0
  %533 = vmatpush.msra.mxu0 %v125
  %534 = vmatpush.msra.mxu0 %v124
  %535 = vmatpush.msra.mxu0 %v123
  %536 = vmatpush.msra.mxu0 %v122
  %537 = vmatmul.f32.gmra.mxu0 %v519
  %v538 = vpop.f32.mrf.mxu0
  %v539 = vadd.f32 0.0, %v538
  %540 = vdwg.mxu0
  %v541 = vadd.f32 %v515, %v539
  %v542 = vxor.u32 %v541, 2147483648
  %v543 = vmul.f32 %v542, 1.442695
  %v544 = vpow.pop %v543
  %v545 = vadd.f32 %v544, 1.0
  %v546 = vrcp.pop %v545
  %v547 = vmul.f32 %v545, %v546
  %v548 = vsub.f32 1.0, %v547
  %v549 = vmul.f32 %v546, %v548
  %v550 = vadd.f32 %v546, %v549
  %vm551 = vweird.f32 %v545
  %vm552 = vweird.f32 %v546
  %vm553 = vmor %vm551, %vm552
  %v554 = vsel %vm553, %v546, %v550
  %v555 = vand.u32 2147483647, %v545
  %vm556 = vcmp.eq.f32.partialorder %v555, 8.507059e+37
  %v557 = vand.u32 %v545, 2147483648
  %v558 = vor.u32 1.1754944e-38, %v557
  %v559 = vsel %vm556, %v558, %v554
  %v560 = vmul.f32 1.0, %v559
  %v561 = vtanh.pop %v541
  %v562 = vmul.f32 %v560, %v507
  %564 = vrot.lane.b32.xlu0 %v561, 64
  %v565 = vpop.permute.xlu0 %564
  %v567 = vmul.f32 %v560, %v565
  %569 = vrot.lane.b32.xlu0 %v567, 32
  %v570 = vpop.permute.xlu0 %569
  %v572 = vadd.f32 %v562, %v570
  %v573 = vtanh.pop %v572
  %575 = vrot.lane.b32.xlu0 %v573, 64
  %v576 = vpop.permute.xlu0 %575
  %v578 = vmul.f32 %v560, %v576
  %s579 = scalar_lea.vmem [#allocation2], 56
  %v580 = vld [vmem:[%s579] sm:$0xff]
  %582 = vrot.lane.b32.xlu0 %v578, 32
  %v583 = vpop.permute.xlu0 %582
  %v584 = vsel %vm127, %v583, 0
  %586 = vmatpush.msra.mxu0 0.0
  %587 = vmatpush.msra.mxu0 0.0
  %588 = vmatpush.msra.mxu0 0.0
  %589 = vmatpush.msra.mxu0 0.0
  %590 = vmatpush.msra.mxu0 0.0
  %591 = vmatpush.msra.mxu0 0.0
  %592 = vmatpush.msra.mxu0 0.0
  %593 = vmatpush.msra.mxu0 0.0
  %594 = vmatpush.msra.mxu0 0.0
  %595 = vmatpush.msra.mxu0 0.0
  %596 = vmatpush.msra.mxu0 0.0
  %597 = vmatpush.msra.mxu0 0.0
  %598 = vmatpush.msra.mxu0 %v125
  %599 = vmatpush.msra.mxu0 %v124
  %600 = vmatpush.msra.mxu0 %v123
  %601 = vmatpush.msra.mxu0 %v122
  %602 = vmatmul.f32.gmra.mxu0 %v584
  %v603 = vpop.f32.mrf.mxu0
  %v604 = vadd.f32 0.0, %v603
  %605 = vdwg.mxu0
  %v606 = vadd.f32 %v580, %v604
  %v607 = vxor.u32 %v606, 2147483648
  %v608 = vmul.f32 %v607, 1.442695
  %v609 = vpow.pop %v608
  %v610 = vadd.f32 %v609, 1.0
  %v611 = vrcp.pop %v610
  %v612 = vmul.f32 %v610, %v611
  %v613 = vsub.f32 1.0, %v612
  %v614 = vmul.f32 %v611, %v613
  %v615 = vadd.f32 %v611, %v614
  %vm616 = vweird.f32 %v610
  %vm617 = vweird.f32 %v611
  %vm618 = vmor %vm616, %vm617
  %v619 = vsel %vm618, %v611, %v615
  %v620 = vand.u32 2147483647, %v610
  %vm621 = vcmp.eq.f32.partialorder %v620, 8.507059e+37
  %v622 = vand.u32 %v610, 2147483648
  %v623 = vor.u32 1.1754944e-38, %v622
  %v624 = vsel %vm621, %v623, %v619
  %v625 = vmul.f32 1.0, %v624
  %v626 = vtanh.pop %v606
  %v627 = vmul.f32 %v625, %v572
  %629 = vrot.lane.b32.xlu0 %v626, 64
  %v630 = vpop.permute.xlu0 %629
  %v632 = vmul.f32 %v625, %v630
  %634 = vrot.lane.b32.xlu0 %v632, 32
  %v635 = vpop.permute.xlu0 %634
  %v637 = vadd.f32 %v627, %v635
  %v638 = vtanh.pop %v637
  %640 = vrot.lane.b32.xlu0 %v638, 64
  %v641 = vpop.permute.xlu0 %640
  %v643 = vmul.f32 %v625, %v641
  %v644 = vld [vmem:[%s4] sm:$0xff]
  %v645 = vld [vmem:[%s4 + $0x8] sm:$0xff]
  %v646 = vld [vmem:[%s4 + $0x10] sm:$0xff]
  %v647 = vld [vmem:[%s4 + $0x18] sm:$0xff]
  %v648 = vld [vmem:[%s5] sm:$0x1]
  %v650 = vperm.slane %v648, 0
  %653 = vrot.lane.b32.xlu0 %v643, 32
  %v654 = vpop.permute.xlu0 %653
  %v655 = vsel %vm127, %v654, 0
  %657 = vmatpush.msra.mxu0 0.0
  %658 = vmatpush.msra.mxu0 0.0
  %659 = vmatpush.msra.mxu0 0.0
  %660 = vmatpush.msra.mxu0 0.0
  %661 = vmatpush.msra.mxu0 0.0
  %662 = vmatpush.msra.mxu0 0.0
  %663 = vmatpush.msra.mxu0 0.0
  %664 = vmatpush.msra.mxu0 0.0
  %665 = vmatpush.msra.mxu0 0.0
  %666 = vmatpush.msra.mxu0 0.0
  %667 = vmatpush.msra.mxu0 0.0
  %668 = vmatpush.msra.mxu0 0.0
  %669 = vmatpush.msra.mxu0 %v647
  %670 = vmatpush.msra.mxu0 %v646
  %671 = vmatpush.msra.mxu0 %v645
  %672 = vmatpush.msra.mxu0 %v644
  %673 = vmatmul.f32.gmra.mxu0 %v655
  %v674 = vpop.f32.mrf.mxu0
  %v675 = vadd.f32 %v650, %v674
  %676 = vdwg.mxu0
  %v677 = vmax.f32 %v675, 0.0
  %v678 = vld [vmem:[%s6] sm:$0xff]
  %v679 = vld [vmem:[%s6 + $0x8] sm:$0xff]
  %v680 = vld [vmem:[%s6 + $0x10] sm:$0xff]
  %v681 = vld [vmem:[%s6 + $0x18] sm:$0xff]
  %v682 = vld [vmem:[#allocation3] sm:$0x1]
  %v684 = vperm.slane %v682, 0
  %v687 = vsel %vm127, %v677, 0
  %689 = vmatpush.msra.mxu0 0.0
  %690 = vmatpush.msra.mxu0 0.0
  %691 = vmatpush.msra.mxu0 0.0
  %692 = vmatpush.msra.mxu0 0.0
  %693 = vmatpush.msra.mxu0 0.0
  %694 = vmatpush.msra.mxu0 0.0
  %695 = vmatpush.msra.mxu0 0.0
  %696 = vmatpush.msra.mxu0 0.0
  %697 = vmatpush.msra.mxu0 0.0
  %698 = vmatpush.msra.mxu0 0.0
  %699 = vmatpush.msra.mxu0 0.0
  %700 = vmatpush.msra.mxu0 0.0
  %701 = vmatpush.msra.mxu0 %v681
  %702 = vmatpush.msra.mxu0 %v680
  %703 = vmatpush.msra.mxu0 %v679
  %704 = vmatpush.msra.mxu0 %v678
  %705 = vmatmul.f32.gmra.mxu0 %v687
  %v706 = vpop.f32.mrf.mxu0
  %v707 = vadd.f32 %v684, %v706
  %708 = vdwg.mxu0
  %vm709 = vcmask 7168
  %710 = vst.msk [vmem:[%s8] sm:$0xff] %vm709, %v707
  // Predicated region
  $region34: #{tpu_custom_call.1} parent=0 // pred_check
    _
  $region35: #{tpu_custom_call.1} parent=0 // pred_check_branch
    %712 = sbr.rel (0) target = $region37
  $region36: #{tpu_custom_call.1} parent=0 // pred_region
    _
  $region37: #{tpu_custom_call.1} parent=0 // pred_fallthru
    _
  // Predicated region
  $region38: #{tpu_custom_call.1} parent=0 // pred_check
    _
  $region39: #{tpu_custom_call.1} parent=0 // pred_check_branch
    %714 = sbr.rel (0) target = $region41
  $region40: #{tpu_custom_call.1} parent=0 // pred_region
    _
  $region41: #{tpu_custom_call.1} parent=0 // pred_fallthru
    _

</llo_original>
